<compile_context>
chip_gen: v6e
topology: v6e:2x2x1
jax: 0.10.0
libtpu: 0.0.40
codegen_flags: <defaults>
</compile_context>

<pallas_src>
import functools

import jax
import jax.numpy as jnp
from jax import lax
from jax.experimental import pallas as pl
from jax.experimental.pallas import tpu as pltpu

ALPHA_EDGE = 0.25
GAMMA_EDGE = 2.0
ALPHA_NODE = 0.25
GAMMA_NODE = 2.0
LANES = 128
MAX_BLOCK_ROWS = 2048   # 2048 x 128 = 256Ki elements / layer / block


def _cdiv(a, b):
    return -(-a // b)


def _round_up(x, m):
    return ((x + m - 1) // m) * m


# --------------------------------------------------------------------------
# Kernel: sigmoid focal loss (all layers fused) + accuracy counters.
# --------------------------------------------------------------------------
def _focal_kernel(x_ref, t_ref, out_ref,
                  loss_acc, cpos_acc, cneg_acc, pos_acc,
                  *, alpha, gamma, block_rows, half, n_valid):
    c = pl.program_id(0)          # megacore split (parallel)
    i = pl.program_id(1)          # row-block index within this core (arbitrary)

    @pl.when(i == 0)
    def _init():
        loss_acc[...] = jnp.zeros_like(loss_acc)
        cpos_acc[...] = jnp.zeros_like(cpos_acc)
        cneg_acc[...] = jnp.zeros_like(cneg_acc)
        pos_acc[...] = jnp.zeros_like(pos_acc)

    # Global element index of every slot in this block.  Uses the UNCLAMPED
    # block id so that the duplicate block re-read by an out-of-range grid step
    # (clamped index map) masks to zero and contributes nothing.
    blk = c * half + i
    row = lax.broadcasted_iota(jnp.int32, (block_rows, LANES), 0)
    lane = lax.broadcasted_iota(jnp.int32, (block_rows, LANES), 1)
    gidx = (blk * block_rows + row) * LANES + lane
    valid = gidx < n_valid
    v = valid.astype(jnp.float32)                     # (br, 128)

    # Clean DMA-padding garbage (could be NaN/Inf) before any math.
    t = jnp.where(valid, t_ref[...], 0.0)             # (br, 128), targets in {0,1}
    x = jnp.where(valid[None], x_ref[...], 0.0)       # (L, br, 128)

    # Per-tile factors (independent of the layer).
    s = 2.0 * t - 1.0                                 # {-1, +1}
    alpha_t = (1.0 - alpha) + (2.0 * alpha - 1.0) * t # alpha*t + (1-alpha)*(1-t)
    av = alpha_t * v                                  # fold validity mask in

    # --- sigmoid focal loss (torchvision semantics), all layers at once ------
    # z = (2t-1)*x ; p_t = sigmoid(z) ; ce = -log(p_t) = softplus(-z)
    # q = 1 - p_t = sigmoid(-z) ; loss = alpha_t * ce * q**gamma
    z = x * s[None]                                   # (L, br, 128)
    e = jnp.exp(-jnp.abs(x))                          # == exp(-|z|)  (1 EUP)
    ce = jnp.maximum(-z, 0.0) + jnp.log1p(e)          # stable softplus (1 EUP)
    r = 1.0 / (1.0 + e)                               # (1 EUP recip)
    q = jnp.where(z >= 0.0, e, 1.0) * r               # sigmoid(-z)
    if gamma == 2.0:
        mod = q * q                                   # avoid pow (log+exp)
    else:
        mod = q ** gamma
    loss = jnp.sum(ce * mod, axis=0) * av             # (br, 128), summed over L
    loss_acc[...] += loss

    # --- accuracy on last logits layer: sigmoid(x) > 0.5  <=>  x > 0 ---------
    pred = (x[-1] > 0.0).astype(jnp.float32)          # (br, 128)
    correct = (pred == t).astype(jnp.float32) * v
    cpos_acc[...] += correct * t
    cneg_acc[...] += correct * (1.0 - t)
    pos_acc[...] += t                                  # t is already masked

    # --- final sublane reduce -> tiny lane-dense output block ---------------
    @pl.when(i == half - 1)
    def _finalize():
        out_ref[...] = jnp.concatenate(
            [jnp.sum(loss_acc[...], axis=0, keepdims=True),
             jnp.sum(cpos_acc[...], axis=0, keepdims=True),
             jnp.sum(cneg_acc[...], axis=0, keepdims=True),
             jnp.sum(pos_acc[...], axis=0, keepdims=True)],
            axis=0)[None]                              # (1, 4, 128)


# --------------------------------------------------------------------------
# Pallas wrapper for one focal-loss pass (edge or node).
# --------------------------------------------------------------------------
def _run_focal(logits_list, target, n, *, alpha, gamma,
               max_block_rows=MAX_BLOCK_ROWS):
    """logits_list: list of (n,) f32; target: (n,) f32 in {0,1}."""
    num_layers = len(logits_list)
    R = _cdiv(n, LANES)                 # rows of 128 lanes
    pad = R * LANES - n

    x = jnp.stack(logits_list)          # (L, n)
    t = target
    if pad:
        x = jnp.pad(x, ((0, 0), (0, pad)))
        t = jnp.pad(t, (0, pad))
    x = x.reshape(num_layers, R, LANES)
    t = t.reshape(R, LANES)

    block_rows = min(max_block_rows, _round_up(_cdiv(R, 2), 8))
    if block_rows >= R:
        block_rows = R                  # single block == full dim (always legal)
    n_blocks = _cdiv(R, block_rows)
    half = _cdiv(n_blocks, 2)           # row-blocks per "core"
    nb1 = n_blocks - 1

    kernel = functools.partial(
        _focal_kernel, alpha=alpha, gamma=gamma,
        block_rows=block_rows, half=half, n_valid=n)

    def x_map(c, i):
        return (0, jnp.minimum(c * half + i, nb1), 0)

    def t_map(c, i):
        return (jnp.minimum(c * half + i, nb1), 0)

    out = pl.pallas_call(
        kernel,
        out_shape=jax.ShapeDtypeStruct((2, 4, LANES), jnp.float32),
        grid=(2, half),
        in_specs=[
            pl.BlockSpec((num_layers, block_rows, LANES), x_map),
            pl.BlockSpec((block_rows, LANES), t_map),
        ],
        out_specs=pl.BlockSpec((1, 4, LANES), lambda c, i: (c, 0, 0)),
        scratch_shapes=[pltpu.VMEM((block_rows, LANES), jnp.float32)] * 4,
        compiler_params=pltpu.CompilerParams(
            dimension_semantics=("parallel", "arbitrary"),
            vmem_limit_bytes=32 * 1024 * 1024),
    )(x, t)
    return out                          # (2, 4, 128): [loss, c&pos, c&neg, pos]


def _finalize(out, n, prefix, mode):
    """Tiny XLA-fused epilogue: combine the two per-core partial rows."""
    sums = jnp.sum(out, axis=(0, 2))    # (4,)
    count = jnp.float32(n)
    loss = sums[0] / count              # == sum over layers of per-layer means
    cp, cn, pos = sums[1], sums[2], sums[3]
    neg = count - pos
    correct = cp + cn
    one = jnp.float32(1.0)
    log = {
        f"{mode} bce loss {prefix}": jnp.stack([loss, one]),
        f"{mode} accuracy {prefix}": jnp.stack([
            correct / count, one,
            jnp.where(neg > 0.5, cn / jnp.maximum(neg, one), 0.0),
            jnp.where(neg > 0.5, one, 0.0),
            jnp.where(pos > 0.5, cp / jnp.maximum(pos, one), 0.0),
            jnp.where(pos > 0.5, one, 0.0),
        ]),
    }
    return loss, log


# --------------------------------------------------------------------------
# Forward pass
# --------------------------------------------------------------------------
def gnn_loss_forward(edge_logits, node_logits, point_instances, point_categories,
                     batch, edge_index, *, edge_weight=1.0, node_weight=1.0,
                     mode="train", max_block_rows=MAX_BLOCK_ROWS):
    E = edge_index.shape[1]
    N = point_instances.shape[0]

    # Targets computed in the wrapper (the gathers fuse there): a single f32
    # row per pass is all the kernel reads besides the logits.
    src, dst = edge_index[0], edge_index[1]
    pi_src = point_instances[src]
    tgt_e = ((pi_src == point_instances[dst])
             & (batch[src] == batch[dst])
             & (pi_src != 0)                      # background src -> False
             & (point_categories[src] != 3)       # set_3_to_false
             ).astype(jnp.float32)
    tgt_n = ((point_instances != 0)
             & (point_categories != 3)            # is_object & set_3_to_false
             ).astype(jnp.float32)

    e_list = [e.reshape(-1).astype(jnp.float32) for e in edge_logits]
    n_list = [nl.reshape(-1).astype(jnp.float32) for nl in node_logits]

    edge_out = _run_focal(e_list, tgt_e, E, alpha=ALPHA_EDGE, gamma=GAMMA_EDGE,
                          max_block_rows=max_block_rows)
    node_out = _run_focal(n_list, tgt_n, N, alpha=ALPHA_NODE, gamma=GAMMA_NODE,
                          max_block_rows=max_block_rows)

    bce_loss_edge, edge_log = _finalize(edge_out, E, "edge", mode)
    bce_loss_node, node_log = _finalize(node_out, N, "node", mode)

    loss = edge_weight * bce_loss_edge + node_weight * bce_loss_node
    return loss, {**edge_log, **node_log}


# --------------------------------------------------------------------------
# Pure-JAX reference (for verification)
# --------------------------------------------------------------------------
def _focal_ref(x, t, alpha, gamma):
    p = jax.nn.sigmoid(x)
    ce = jnp.maximum(x, 0.0) - x * t + jnp.log1p(jnp.exp(-jnp.abs(x)))
    p_t = p * t + (1.0 - p) * (1.0 - t)
    loss = ce * (1.0 - p_t) ** gamma
    loss = (alpha * t + (1.0 - alpha) * (1.0 - t)) * loss
    return jnp.mean(loss)


if __name__ == "__main__":
    key = jax.random.PRNGKey(0)
    N, E, L = 1000, 2500, 2
    ks = jax.random.split(key, 3 + 2 * L)

    point_instances = jax.random.randint(ks[0], (N,), 0, 5, dtype=jnp.int32)
    point_categories = jax.random.randint(ks[1], (N,), 0, 6, dtype=jnp.int32)
    batch = (jnp.arange(N, dtype=jnp.int32) >= N // 2).astype(jnp.int32)
    edge_index = jax.random.randint(ks[2], (2, E), 0, N, dtype=jnp.int32)
    edge_logits = [jax.random.normal(ks[3 + l], (E, 1), dtype=jnp.float32)
                   for l in range(L)]
    node_logits = [jax.random.normal(ks[3 + L + l], (N, 1), dtype=jnp.float32)
                   for l in range(L)]

    # ------------------------- reference values ------------------------------
    src, dst = edge_index[0], edge_index[1]
    tgt_e = ((point_instances[src] == point_instances[dst])
             & (batch[src] == batch[dst])
             & (point_instances[src] != 0)
             & (point_categories[src] != 3)).astype(jnp.float32)
    tgt_n = ((point_instances != 0) & (point_categories != 3)).astype(jnp.float32)
    ref_edge = float(sum(_focal_ref(e.reshape(-1), tgt_e, ALPHA_EDGE, GAMMA_EDGE)
                         for e in edge_logits))
    ref_node = float(sum(_focal_ref(nl.reshape(-1), tgt_n, ALPHA_NODE, GAMMA_NODE)
                         for nl in node_logits))
    ref_loss = ref_edge + ref_node

    pred_e = (edge_logits[-1].reshape(-1) > 0.0).astype(jnp.float32)
    correct_e = (pred_e == tgt_e)
    acc_ref = float(jnp.mean(correct_e.astype(jnp.float32)))
    neg_e = tgt_e == 0
    pos_e = tgt_e == 1
    accn_ref = float(jnp.sum((correct_e & neg_e).astype(jnp.float32))
                     / jnp.maximum(jnp.sum(neg_e.astype(jnp.float32)), 1.0))
    accp_ref = float(jnp.sum((correct_e & pos_e).astype(jnp.float32))
                     / jnp.maximum(jnp.sum(pos_e.astype(jnp.float32)), 1.0))

    # Default tiles + tiny tiles (the latter exercises multi-block grids,
    # the clamped index map and the ragged-tail masking path).
    for mbr in (MAX_BLOCK_ROWS, 8):
        loss, log_dict = gnn_loss_forward(edge_logits, node_logits,
                                          point_instances, point_categories,
                                          batch, edge_index, max_block_rows=mbr)
        loss = jax.block_until_ready(loss)

        assert abs(float(loss) - ref_loss) <= 1e-3 * max(1.0, abs(ref_loss)), \
            (mbr, float(loss), ref_loss)
        le = float(log_dict["train bce loss edge"][0])
        assert abs(le - ref_edge) <= 1e-3 * max(1.0, abs(ref_edge)), (mbr, le, ref_edge)
        acc = log_dict["train accuracy edge"]
        assert abs(float(acc[0]) - acc_ref) < 1e-5, (mbr, float(acc[0]), acc_ref)
        assert abs(float(acc[2]) - accn_ref) < 1e-5, (mbr, float(acc[2]), accn_ref)
        assert abs(float(acc[4]) - accp_ref) < 1e-5, (mbr, float(acc[4]), accp_ref)

    print("KERNEL_OK")
</pallas_src>

<mosaic_0001>
module attributes {stable_mosaic.version = 11 : i64} {
  func.func @_focal_kernel(%arg0: i32, %arg1: i32, %arg2: memref<2x16x128xf32, #tpu.memory_space<vmem>>, %arg3: memref<16x128xf32, #tpu.memory_space<vmem>>, %arg4: memref<1x4x128xf32, #tpu.memory_space<vmem>>, %arg5: memref<16x128xf32, #tpu.memory_space<vmem>>, %arg6: memref<16x128xf32, #tpu.memory_space<vmem>>, %arg7: memref<16x128xf32, #tpu.memory_space<vmem>>, %arg8: memref<16x128xf32, #tpu.memory_space<vmem>>) attributes {dimension_semantics = [#tpu.dimension_semantics<parallel>, #tpu.dimension_semantics<arbitrary>], iteration_bounds = array<i64: 2, 1>, scalar_prefetch = 0 : i64, scratch_operands = 4 : i64, tpu.core_type = #tpu.core_type<tc>, window_params = [{transform_indices = @transform_0, window_bounds = array<i64: 2, 16, 128>}, {transform_indices = @transform_1, window_bounds = array<i64: 16, 128>}, {transform_indices = @transform_2, window_bounds = array<i64: 1, 4, 128>}]} {
    %c0_i32 = arith.constant 0 : i32
    %0 = arith.cmpi eq, %arg1, %c0_i32 : i32
    %1 = arith.extui %0 : i1 to i32
    %c0_i32_0 = arith.constant 0 : i32
    %2 = arith.cmpi ne, %1, %c0_i32_0 : i32
    scf.if %2 {
      %cst_38 = arith.constant 0.000000e+00 : f32
      %90 = vector.broadcast %cst_38 : f32 to vector<16x128xf32>
      %c0_39 = arith.constant 0 : index
      %c0_40 = arith.constant 0 : index
      %91 = vector.load %arg5[%c0_39, %c0_40] : memref<16x128xf32, #tpu.memory_space<vmem>>, vector<16x128xf32>
      tpu.vector_store %arg5[%c0_39, %c0_40], %90 {strides = array<i32>} : memref<16x128xf32, #tpu.memory_space<vmem>>, vector<16x128xf32>,
      %cst_41 = arith.constant 0.000000e+00 : f32
      %92 = vector.broadcast %cst_41 : f32 to vector<16x128xf32>
      %c0_42 = arith.constant 0 : index
      %c0_43 = arith.constant 0 : index
      %93 = vector.load %arg6[%c0_42, %c0_43] : memref<16x128xf32, #tpu.memory_space<vmem>>, vector<16x128xf32>
      tpu.vector_store %arg6[%c0_42, %c0_43], %92 {strides = array<i32>} : memref<16x128xf32, #tpu.memory_space<vmem>>, vector<16x128xf32>,
      %cst_44 = arith.constant 0.000000e+00 : f32
      %94 = vector.broadcast %cst_44 : f32 to vector<16x128xf32>
      %c0_45 = arith.constant 0 : index
      %c0_46 = arith.constant 0 : index
      %95 = vector.load %arg7[%c0_45, %c0_46] : memref<16x128xf32, #tpu.memory_space<vmem>>, vector<16x128xf32>
      tpu.vector_store %arg7[%c0_45, %c0_46], %94 {strides = array<i32>} : memref<16x128xf32, #tpu.memory_space<vmem>>, vector<16x128xf32>,
      %cst_47 = arith.constant 0.000000e+00 : f32
      %96 = vector.broadcast %cst_47 : f32 to vector<16x128xf32>
      %c0_48 = arith.constant 0 : index
      %c0_49 = arith.constant 0 : index
      %97 = vector.load %arg8[%c0_48, %c0_49] : memref<16x128xf32, #tpu.memory_space<vmem>>, vector<16x128xf32>
      tpu.vector_store %arg8[%c0_48, %c0_49], %96 {strides = array<i32>} : memref<16x128xf32, #tpu.memory_space<vmem>>, vector<16x128xf32>,
    } else {
    }
    %c1_i32 = arith.constant 1 : i32
    %3 = arith.muli %arg0, %c1_i32 : i32
    %4 = arith.addi %3, %arg1 : i32
    %5 = tpu.iota {dimensions = array<i32: 0>} : vector<16x128xi32>
    %6 = tpu.iota {dimensions = array<i32: 1>} : vector<16x128xi32>
    %c16_i32 = arith.constant 16 : i32
    %7 = arith.muli %4, %c16_i32 : i32
    %8 = vector.broadcast %7 : i32 to vector<16x128xi32>
    %9 = arith.addi %8, %5 : vector<16x128xi32>
    %c128_i32 = arith.constant 128 : i32
    %10 = vector.broadcast %c128_i32 : i32 to vector<16x128xi32>
    %11 = arith.muli %9, %10 : vector<16x128xi32>
    %12 = arith.addi %11, %6 : vector<16x128xi32>
    %c2500_i32 = arith.constant 2500 : i32
    %13 = vector.broadcast %c2500_i32 : i32 to vector<16x128xi32>
    %14 = arith.cmpi slt, %12, %13 : vector<16x128xi32>
    %15 = arith.extui %14 : vector<16x128xi1> to vector<16x128xi32>
    %16 = arith.sitofp %15 : vector<16x128xi32> to vector<16x128xf32>
    %c0 = arith.constant 0 : index
    %c0_1 = arith.constant 0 : index
    %17 = vector.load %arg3[%c0, %c0_1] : memref<16x128xf32, #tpu.memory_space<vmem>>, vector<16x128xf32>
    %cst = arith.constant 0.000000e+00 : f32
    %18 = vector.broadcast %cst : f32 to vector<16x128xf32>
    %19 = arith.select %14, %17, %18 : vector<16x128xi1>, vector<16x128xf32>
    %20 = vector.shape_cast %14 : vector<16x128xi1> to vector<1x16x128xi1>
    %c0_2 = arith.constant 0 : index
    %c0_3 = arith.constant 0 : index
    %c0_4 = arith.constant 0 : index
    %21 = vector.load %arg2[%c0_2, %c0_3, %c0_4] : memref<2x16x128xf32, #tpu.memory_space<vmem>>, vector<2x16x128xf32>
    %cst_5 = arith.constant 0.000000e+00 : f32
    %22 = vector.shape_cast %20 : vector<1x16x128xi1> to vector<1x16x128xi1>
    %23 = vector.broadcast %22 : vector<1x16x128xi1> to vector<2x16x128xi1>
    %24 = vector.broadcast %cst_5 : f32 to vector<2x16x128xf32>
    %25 = arith.select %23, %21, %24 : vector<2x16x128xi1>, vector<2x16x128xf32>
    %cst_6 = arith.constant 2.000000e+00 : f32
    %26 = vector.broadcast %cst_6 : f32 to vector<16x128xf32>
    %27 = arith.mulf %26, %19 : vector<16x128xf32>
    %cst_7 = arith.constant 1.000000e+00 : f32
    %28 = vector.broadcast %cst_7 : f32 to vector<16x128xf32>
    %29 = arith.subf %27, %28 : vector<16x128xf32>
    %cst_8 = arith.constant -5.000000e-01 : f32
    %30 = vector.broadcast %cst_8 : f32 to vector<16x128xf32>
    %31 = arith.mulf %30, %19 : vector<16x128xf32>
    %cst_9 = arith.constant 7.500000e-01 : f32
    %32 = vector.broadcast %cst_9 : f32 to vector<16x128xf32>
    %33 = arith.addf %32, %31 : vector<16x128xf32>
    %34 = arith.mulf %33, %16 : vector<16x128xf32>
    %35 = vector.shape_cast %29 : vector<16x128xf32> to vector<1x16x128xf32>
    %36 = vector.broadcast %35 : vector<1x16x128xf32> to vector<2x16x128xf32>
    %37 = arith.mulf %25, %36 : vector<2x16x128xf32>
    %38 = math.absf %25 : vector<2x16x128xf32>
    %cst_10 = arith.constant 0.000000e+00 : f32
    %39 = vector.broadcast %cst_10 : f32 to vector<2x16x128xf32>
    %40 = arith.subf %39, %38 : vector<2x16x128xf32>
    %41 = math.exp %40 : vector<2x16x128xf32>
    %cst_11 = arith.constant 0.000000e+00 : f32
    %42 = vector.broadcast %cst_11 : f32 to vector<2x16x128xf32>
    %43 = arith.subf %42, %37 : vector<2x16x128xf32>
    %cst_12 = arith.constant 0.000000e+00 : f32
    %44 = vector.broadcast %cst_12 : f32 to vector<2x16x128xf32>
    %45 = arith.maximumf %43, %44 : vector<2x16x128xf32>
    %46 = math.log1p %41 : vector<2x16x128xf32>
    %47 = arith.addf %45, %46 : vector<2x16x128xf32>
    %cst_13 = arith.constant 1.000000e+00 : f32
    %48 = vector.broadcast %cst_13 : f32 to vector<2x16x128xf32>
    %49 = arith.addf %48, %41 : vector<2x16x128xf32>
    %cst_14 = arith.constant 1.000000e+00 : f32
    %50 = vector.broadcast %cst_14 : f32 to vector<2x16x128xf32>
    %51 = arith.divf %50, %49 : vector<2x16x128xf32>
    %cst_15 = arith.constant 0.000000e+00 : f32
    %52 = vector.broadcast %cst_15 : f32 to vector<2x16x128xf32>
    %53 = arith.cmpf oge, %37, %52 : vector<2x16x128xf32>
    %cst_16 = arith.constant 1.000000e+00 : f32
    %54 = vector.broadcast %cst_16 : f32 to vector<2x16x128xf32>
    %55 = arith.select %53, %41, %54 : vector<2x16x128xi1>, vector<2x16x128xf32>
    %56 = arith.mulf %55, %51 : vector<2x16x128xf32>
    %57 = arith.mulf %56, %56 : vector<2x16x128xf32>
    %58 = arith.mulf %47, %57 : vector<2x16x128xf32>
    %cst_17 = arith.constant dense<0.000000e+00> : vector<16x128xf32>
    %59 = vector.multi_reduction <add>, %58, %cst_17 [0] : vector<2x16x128xf32> to vector<16x128xf32>
    %60 = arith.mulf %59, %34 : vector<16x128xf32>
    %c0_18 = arith.constant 0 : index
    %c0_19 = arith.constant 0 : index
    %61 = vector.load %arg5[%c0_18, %c0_19] : memref<16x128xf32, #tpu.memory_space<vmem>>, vector<16x128xf32>
    %62 = arith.addf %61, %60 : vector<16x128xf32>
    %c0_20 = arith.constant 0 : index
    %c0_21 = arith.constant 0 : index
    %63 = vector.load %arg5[%c0_20, %c0_21] : memref<16x128xf32, #tpu.memory_space<vmem>>, vector<16x128xf32>
    tpu.vector_store %arg5[%c0_20, %c0_21], %62 {strides = array<i32>} : memref<16x128xf32, #tpu.memory_space<vmem>>, vector<16x128xf32>,
    %64 = vector.extract_strided_slice %25 {offsets = [1, 0, 0], sizes = [1, 16, 128], strides = [1, 1, 1]} : vector<2x16x128xf32> to vector<1x16x128xf32>
    %65 = vector.shape_cast %64 : vector<1x16x128xf32> to vector<16x128xf32>
    %cst_22 = arith.constant 0.000000e+00 : f32
    %66 = vector.broadcast %cst_22 : f32 to vector<16x128xf32>
    %67 = arith.cmpf ogt, %65, %66 : vector<16x128xf32>
    %68 = arith.extui %67 : vector<16x128xi1> to vector<16x128xi32>
    %69 = arith.sitofp %68 : vector<16x128xi32> to vector<16x128xf32>
    %70 = arith.cmpf oeq, %69, %19 : vector<16x128xf32>
    %71 = arith.extui %70 : vector<16x128xi1> to vector<16x128xi32>
    %72 = arith.sitofp %71 : vector<16x128xi32> to vector<16x128xf32>
    %73 = arith.mulf %72, %16 : vector<16x128xf32>
    %c0_23 = arith.constant 0 : index
    %c0_24 = arith.constant 0 : index
    %74 = vector.load %arg6[%c0_23, %c0_24] : memref<16x128xf32, #tpu.memory_space<vmem>>, vector<16x128xf32>
    %75 = arith.mulf %73, %19 : vector<16x128xf32>
    %76 = arith.addf %74, %75 : vector<16x128xf32>
    %c0_25 = arith.constant 0 : index
    %c0_26 = arith.constant 0 : index
    %77 = vector.load %arg6[%c0_25, %c0_26] : memref<16x128xf32, #tpu.memory_space<vmem>>, vector<16x128xf32>
    tpu.vector_store %arg6[%c0_25, %c0_26], %76 {strides = array<i32>} : memref<16x128xf32, #tpu.memory_space<vmem>>, vector<16x128xf32>,
    %c0_27 = arith.constant 0 : index
    %c0_28 = arith.constant 0 : index
    %78 = vector.load %arg7[%c0_27, %c0_28] : memref<16x128xf32, #tpu.memory_space<vmem>>, vector<16x128xf32>
    %cst_29 = arith.constant 1.000000e+00 : f32
    %79 = vector.broadcast %cst_29 : f32 to vector<16x128xf32>
    %80 = arith.subf %79, %19 : vector<16x128xf32>
    %81 = arith.mulf %73, %80 : vector<16x128xf32>
    %82 = arith.addf %78, %81 : vector<16x128xf32>
    %c0_30 = arith.constant 0 : index
    %c0_31 = arith.constant 0 : index
    %83 = vector.load %arg7[%c0_30, %c0_31] : memref<16x128xf32, #tpu.memory_space<vmem>>, vector<16x128xf32>
    tpu.vector_store %arg7[%c0_30, %c0_31], %82 {strides = array<i32>} : memref<16x128xf32, #tpu.memory_space<vmem>>, vector<16x128xf32>,
    %c0_32 = arith.constant 0 : index
    %c0_33 = arith.constant 0 : index
    %84 = vector.load %arg8[%c0_32, %c0_33] : memref<16x128xf32, #tpu.memory_space<vmem>>, vector<16x128xf32>
    %85 = arith.addf %84, %19 : vector<16x128xf32>
    %c0_34 = arith.constant 0 : index
    %c0_35 = arith.constant 0 : index
    %86 = vector.load %arg8[%c0_34, %c0_35] : memref<16x128xf32, #tpu.memory_space<vmem>>, vector<16x128xf32>
    tpu.vector_store %arg8[%c0_34, %c0_35], %85 {strides = array<i32>} : memref<16x128xf32, #tpu.memory_space<vmem>>, vector<16x128xf32>,
    %c0_i32_36 = arith.constant 0 : i32
    %87 = arith.cmpi eq, %arg1, %c0_i32_36 : i32
    %88 = arith.extui %87 : i1 to i32
    %c0_i32_37 = arith.constant 0 : i32
    %89 = arith.cmpi ne, %88, %c0_i32_37 : i32
    scf.if %89 {
      %c0_38 = arith.constant 0 : index
      %c0_39 = arith.constant 0 : index
      %90 = vector.load %arg5[%c0_38, %c0_39] : memref<16x128xf32, #tpu.memory_space<vmem>>, vector<16x128xf32>
      %cst_40 = arith.constant dense<0.000000e+00> : vector<128xf32>
      %91 = vector.multi_reduction <add>, %90, %cst_40 [0] : vector<16x128xf32> to vector<128xf32>
      %92 = vector.shape_cast %91 : vector<128xf32> to vector<1x128xf32>
      %c0_41 = arith.constant 0 : index
      %c0_42 = arith.constant 0 : index
      %93 = vector.load %arg6[%c0_41, %c0_42] : memref<16x128xf32, #tpu.memory_space<vmem>>, vector<16x128xf32>
      %cst_43 = arith.constant dense<0.000000e+00> : vector<128xf32>
      %94 = vector.multi_reduction <add>, %93, %cst_43 [0] : vector<16x128xf32> to vector<128xf32>
      %95 = vector.shape_cast %94 : vector<128xf32> to vector<1x128xf32>
      %c0_44 = arith.constant 0 : index
      %c0_45 = arith.constant 0 : index
      %96 = vector.load %arg7[%c0_44, %c0_45] : memref<16x128xf32, #tpu.memory_space<vmem>>, vector<16x128xf32>
      %cst_46 = arith.constant dense<0.000000e+00> : vector<128xf32>
      %97 = vector.multi_reduction <add>, %96, %cst_46 [0] : vector<16x128xf32> to vector<128xf32>
      %98 = vector.shape_cast %97 : vector<128xf32> to vector<1x128xf32>
      %c0_47 = arith.constant 0 : index
      %c0_48 = arith.constant 0 : index
      %99 = vector.load %arg8[%c0_47, %c0_48] : memref<16x128xf32, #tpu.memory_space<vmem>>, vector<16x128xf32>
      %cst_49 = arith.constant dense<0.000000e+00> : vector<128xf32>
      %100 = vector.multi_reduction <add>, %99, %cst_49 [0] : vector<16x128xf32> to vector<128xf32>
      %101 = vector.shape_cast %100 : vector<128xf32> to vector<1x128xf32>
      %102 = tpu.concatenate %92, %95, %98, %101 in 0 : vector<1x128xf32>, vector<1x128xf32>, vector<1x128xf32>, vector<1x128xf32> -> vector<4x128xf32>
      %103 = vector.shape_cast %102 : vector<4x128xf32> to vector<1x4x128xf32>
      %c0_50 = arith.constant 0 : index
      %c0_51 = arith.constant 0 : index
      %c0_52 = arith.constant 0 : index
      %104 = vector.load %arg4[%c0_50, %c0_51, %c0_52] : memref<1x4x128xf32, #tpu.memory_space<vmem>>, vector<1x4x128xf32>
      tpu.vector_store %arg4[%c0_50, %c0_51, %c0_52], %103 {strides = array<i32>} : memref<1x4x128xf32, #tpu.memory_space<vmem>>, vector<1x4x128xf32>,
    } else {
    }
    return
  }
  func.func @transform_0(%arg0: i32, %arg1: i32) -> (i32, i32, i32) {
    %c1_i32 = arith.constant 1 : i32
    %0 = arith.muli %arg0, %c1_i32 : i32
    %1 = arith.addi %0, %arg1 : i32
    %c1_i32_0 = arith.constant 1 : i32
    %2 = arith.minsi %1, %c1_i32_0 : i32
    %c0_i32 = arith.constant 0 : i32
    %c0_i32_1 = arith.constant 0 : i32
    %c0_i32_2 = arith.constant 0 : i32
    return %c0_i32, %2, %c0_i32_1 : i32, i32, i32
  }
  func.func @transform_1(%arg0: i32, %arg1: i32) -> (i32, i32) {
    %c1_i32 = arith.constant 1 : i32
    %0 = arith.muli %arg0, %c1_i32 : i32
    %1 = arith.addi %0, %arg1 : i32
    %c1_i32_0 = arith.constant 1 : i32
    %2 = arith.minsi %1, %c1_i32_0 : i32
    %c0_i32 = arith.constant 0 : i32
    %c0_i32_1 = arith.constant 0 : i32
    return %2, %c0_i32 : i32, i32
  }
  func.func @transform_2(%arg0: i32, %arg1: i32) -> (i32, i32, i32) {
    %c0_i32 = arith.constant 0 : i32
    %c0_i32_0 = arith.constant 0 : i32
    %c0_i32_1 = arith.constant 0 : i32
    return %arg0, %c0_i32, %c0_i32_0 : i32, i32, i32
  }
}

</mosaic_0001>

<llo_original>
// kernel: tpu_custom_call.1
$region0: #{tpu_custom_call.1}
  #allocation0 [shape = 'u32[]', space=smem, size = 0x4, offset = 0x4, fixed_abs, tag = 'smem constant byte address 0x4 - core index']
  #allocation1 [shape = 'u32[144,128]{1,0:T(1,128)}', space=vmem, size = 0x12000, scoped, tag = 'internal scratch']
  #allocation2 [shape = 'f32[16,128]{1,0:T(8,128)}', space=vmem, size = 0x2000, scoped, tag = 'scratch operand']
  #allocation3 [shape = 'f32[16,128]{1,0:T(8,128)}', space=vmem, size = 0x2000, scoped, tag = 'scratch operand']
  #allocation4 [shape = 'f32[16,128]{1,0:T(8,128)}', space=vmem, size = 0x2000, scoped, tag = 'scratch operand']
  #allocation5 [shape = 'f32[16,128]{1,0:T(8,128)}', space=vmem, size = 0x2000, scoped, tag = 'scratch operand']
  %s0 = inlined_call_operand.vmem [shape: f32[2,20,128], index: 0, kind: input, shape index: {}]
  %s1 = inlined_call_operand.vmem [shape: f32[20,128], index: 1, kind: input, shape index: {}]
  %s2 = inlined_call_operand.hbm [shape: f32[2,4,128], index: 2, kind: output, shape index: {}]
  %s3 = sld [smem:[#allocation0]]
  $region101: #{tpu_custom_call.1} parent=0
    _
  %s5 = ssub.s32 1, %s3
  %s6 = scalar_select 0, %s5, %s3
  $region1: #{tpu_custom_call.1} parent=0
    #allocation6 [shape = 'u8[32768]{0}', space=vmem, size = 0x8000, scoped, tag = 'input window, operand 0']
    #allocation7 [shape = 'u8[4096]{0}', space=vmem, size = 0x1000, scoped, tag = 'output window, operand 0']
    #allocation8 [shape = 's32[2]{0}', space=sflag, size = 0x8, scoped, tag = 'scoped memory for tpu_custom_call.1']
    %7 = vsyncpa [#allocation8], 0
    %s8 = scalar_lea.sflag [#allocation8], 1
    %9 = vsyncpa %s8, 0
    loop: start=0, step=1, limit=4
    $region2: #{tpu_custom_call.1} parent=1 // loop_pre_header
      _
    $region3: #{tpu_custom_call.1} parent=1 // loop_header
      %s11 = sphi 0, %s15
      %p12 = scmp.ge.s32.totalorder %s11, 4
      %s18 = sphi 0, %s30
      %s19 = sphi 0, %s26
      %s20 = sphi 0, %s18
      %s21 = sphi 0, %s19
      %s22 = sphi 0, %s20
      %s23 = sphi 0, %s21
      %s39 = sphi 0, %s41
      %s42 = sphi 0, %s39
      %s43 = sphi 0, %s42
      %s59 = sphi 0, %s43
      %s71 = sphi 0, %s73
      %s74 = sphi 0, %s71
      %s75 = sphi 0, %s74
      %s91 = sphi 0, %s75
      %s97 = sphi 0, %s99
      %s100 = sphi 0, %s97
      %s101 = sphi 0, %s100
      %s117 = sphi 0, %s101
    $region4: #{tpu_custom_call.1} parent=1 // loop_header_branch
      %14 = sbr.rel (%p12) target = $region8
    $region5: #{tpu_custom_call.1} parent=1 // loop_body
      %s16 = ssub.s32 %s11, 1
      %s17 = ssub.s32 %s11, 2
      %s24 = sadd.s32 1, %s19
      %p25 = scmp.ge.s32.totalorder %s24, 1
      %s26 = scalar_select %p25, 0, %s24
      %s27 = sadd.s32 1, %s18
      %s28 = scalar_select %p25, %s27, %s18
      %p29 = scmp.ge.s32.totalorder %s28, 2
      %s30 = scalar_select %p29, 0, %s28
      %s31 = sadd.s32 %s18, %s19
      %p32 = scmp.lt.s32.totalorder %s31, 1
      %s33 = scalar_select %p32, %s31, 1
      %s34 = sadd.s32 %s30, %s26
      %p35 = scmp.lt.s32.totalorder %s34, 1
      %s36 = scalar_select %p35, %s34, 1
      %s37 = ssub.s32 %s33, %s36
      %p38 = scmp.eq.s32.totalorder %s37, 0
      %s40 = sadd.s32 %s39, 1
      %s41 = scalar_select %p38, %s39, %s40
      %p44 = pneg %p38
      %p45 = scmp.eq.s32.totalorder %s11, 1
      %p46 = por %p44, %p45
      %p47 = scmp.ne.s32.totalorder %s39, %s42
      %p48 = scmp.eq.s32.totalorder %s11, 0
      %p49 = por %p47, %p48
      %p50 = scmp.ne.s32.totalorder %s39, %s42
      %p51 = scmp.eq.s32.totalorder %s16, 1
      %p52 = por %p50, %p51
      %p53 = scmp.ne.s32.totalorder %s42, %s43
      %p54 = scmp.eq.s32.totalorder %s16, 0
      %p55 = por %p53, %p54
      %p56 = scmp.ne.s32.totalorder %s42, %s43
      %p57 = scmp.eq.s32.totalorder %s17, 1
      %p58 = por %p56, %p57
      %p60 = scmp.ne.s32.totalorder %s43, %s59
      %p61 = scmp.eq.s32.totalorder %s17, 0
      %p62 = por %p60, %p61
      %s63 = sadd.s32 %s18, %s19
      %p64 = scmp.lt.s32.totalorder %s63, 1
      %s65 = scalar_select %p64, %s63, 1
      %s66 = sadd.s32 %s30, %s26
      %p67 = scmp.lt.s32.totalorder %s66, 1
      %s68 = scalar_select %p67, %s66, 1
      %s69 = ssub.s32 %s65, %s68
      %p70 = scmp.eq.s32.totalorder %s69, 0
      %s72 = sadd.s32 %s71, 1
      %s73 = scalar_select %p70, %s71, %s72
      %p76 = pneg %p70
      %p77 = scmp.eq.s32.totalorder %s11, 1
      %p78 = por %p76, %p77
      %p79 = scmp.ne.s32.totalorder %s71, %s74
      %p80 = scmp.eq.s32.totalorder %s11, 0
      %p81 = por %p79, %p80
      %p82 = scmp.ne.s32.totalorder %s71, %s74
      %p83 = scmp.eq.s32.totalorder %s16, 1
      %p84 = por %p82, %p83
      %p85 = scmp.ne.s32.totalorder %s74, %s75
      %p86 = scmp.eq.s32.totalorder %s16, 0
      %p87 = por %p85, %p86
      %p88 = scmp.ne.s32.totalorder %s74, %s75
      %p89 = scmp.eq.s32.totalorder %s17, 1
      %p90 = por %p88, %p89
      %p92 = scmp.ne.s32.totalorder %s75, %s91
      %p93 = scmp.eq.s32.totalorder %s17, 0
      %p94 = por %p92, %p93
      %s95 = ssub.s32 %s18, %s30
      %p96 = scmp.eq.s32.totalorder %s95, 0
      %s98 = sadd.s32 %s97, 1
      %s99 = scalar_select %p96, %s97, %s98
      %p102 = pneg %p96
      %p103 = scmp.eq.s32.totalorder %s11, 1
      %p104 = por %p102, %p103
      %p105 = scmp.ne.s32.totalorder %s97, %s100
      %p106 = scmp.eq.s32.totalorder %s11, 0
      %p107 = por %p105, %p106
      %p108 = scmp.ne.s32.totalorder %s97, %s100
      %p109 = scmp.eq.s32.totalorder %s16, 1
      %p110 = por %p108, %p109
      %p111 = scmp.ne.s32.totalorder %s100, %s101
      %p112 = scmp.eq.s32.totalorder %s16, 0
      %p113 = por %p111, %p112
      %p114 = scmp.ne.s32.totalorder %s100, %s101
      %p115 = scmp.eq.s32.totalorder %s17, 1
      %p116 = por %p114, %p115
      %p118 = scmp.ne.s32.totalorder %s101, %s117
      %p119 = scmp.eq.s32.totalorder %s17, 0
      %p120 = por %p118, %p119
      %p121 = scmp.le.s32.totalorder 1, %s11
      %p122 = scmp.lt.s32.totalorder %s11, 3
      %p123 = pnand %p121, %p122
      %p124 = pneg %p123
      // Predicated region
      $region9: #{tpu_custom_call.1} parent=5 // pred_check
        _
      $region10: #{tpu_custom_call.1} parent=5 // pred_check_branch
        %126 = sbr.rel (%p123) target = $region12
      $region11: #{tpu_custom_call.1} parent=5 // pred_region
        %s127 = ssub.s32 %s11, 1
      $region12: #{tpu_custom_call.1} parent=5 // pred_fallthru
        _
      %p128 = scmp.lt.s32.totalorder %s11, 2
      // Predicated region
      $region13: #{tpu_custom_call.1} parent=5 // pred_check
        %p129 = pneg %p128
      $region14: #{tpu_custom_call.1} parent=5 // pred_check_branch
        %131 = sbr.rel (%p129) target = $region16
      $region15: #{tpu_custom_call.1} parent=5 // pred_region
        // Predicated region
        $region17: #{tpu_custom_call.1} parent=15 // pred_check
          %p132 = pneg %p49
        $region18: #{tpu_custom_call.1} parent=15 // pred_check_branch
          %134 = sbr.rel (%p132) target = $region20
        $region19: #{tpu_custom_call.1} parent=15 // pred_region
          %s135 = sand.u32 %s39, 1
          %s136 = sand.u32 %s39, 1
          %s137 = smul.addr %s136, 32
          %s138 = scalar_lea.vmem [#allocation6], %s137
          %s139 = sadd.s32 %s18, %s19
          %p140 = scmp.lt.s32.totalorder %s139, 1
          %s141 = scalar_select %p140, %s139, 1
          %s142 = smul.u32 2, %s141
          %s143 = ssub.s32 3, %s142
          %p144 = scmp.lt.s32.totalorder %s143, 2
          %s145 = scalar_select %p144, %s143, 2
          %s146 = smul.u32 256, %s145
          %p147 = scmp.ne.s32.totalorder 0, %s146
          %s148 = smul.addr %s142, 8
          %s149 = scalar_lea.vmem %s0, %s148
          // Predicated region
          $region21: #{tpu_custom_call.1} parent=19 // pred_check
            %p150 = pneg %p147
          $region22: #{tpu_custom_call.1} parent=19 // pred_check_branch
            %152 = sbr.rel (%p150) target = $region24
          $region23: #{tpu_custom_call.1} parent=19 // pred_region
            // Predicated region
            $region25: #{tpu_custom_call.1} parent=23 // pred_check
              _
            $region26: #{tpu_custom_call.1} parent=23 // pred_check_branch
              %154 = sbr.rel (0) target = $region28
            $region27: #{tpu_custom_call.1} parent=23 // pred_region
              // Predicated region
              $region47: #{tpu_custom_call.1} parent=27 // pred_check
                _
              $region48: #{tpu_custom_call.1} parent=27 // pred_check_branch
                %212 = sbr.rel (0) target = $region50
              $region49: #{tpu_custom_call.1} parent=27 // pred_region
                %s213 = sshrl.u32 %s145, 1
                // While loop
                $region51: #{tpu_custom_call.1} parent=49 // loop_pre_header
                  _
                $region52: #{tpu_custom_call.1} parent=49 // loop_header
                  %s215 = sphi 0, %s217
                  %p216 = scmp.ge.s32.totalorder %s215, %s213
                  %s220 = sphi 0, %s233
                  %s221 = sphi %s149, %s236
                  %s222 = sphi %s138, %s237
                $region53: #{tpu_custom_call.1} parent=49 // loop_header_branch
                  %219 = sbr.rel (%p216) target = $region57
                $region54: #{tpu_custom_call.1} parent=49 // loop_body
                  %v223 = vld [vmem:[%s221] sm:$0xff]
                  %224 = vst [vmem:[%s222] sm:$0xff] %v223
                  %v225 = vld [vmem:[%s221 + $0x8] sm:$0xff]
                  %226 = vst [vmem:[%s222 + $0x8] sm:$0xff] %v225
                  %v227 = vld [vmem:[%s221 + $0x18] sm:$0xff]
                  %228 = vst [vmem:[%s222 + $0x10] sm:$0xff] %v227
                  %v229 = vld [vmem:[%s221 + $0x20] sm:$0xff]
                  %230 = vst [vmem:[%s222 + $0x18] sm:$0xff] %v229
                  %s231 = sadd.s32 1, %s220
                  %p232 = scmp.ge.s32.totalorder %s231, %s213
                  %s233 = scalar_select %p232, 0, %s231
                  %s234 = smul.u32 %s233, 16
                  %s235 = smul.u32 %s233, 16
                  %s236 = scalar_lea.vmem %s149, %s234
                  %s237 = scalar_lea.vmem %s138, %s235 [#allocation6]
                $region55: #{tpu_custom_call.1} parent=49 // loop_footer
                  %s217 = sadd.s32 %s215, 1
                $region56: #{tpu_custom_call.1} parent=49 // loop_footer_branch
                  %214 = sbr.rel target = $region52
                $region57: #{tpu_custom_call.1} parent=49 // loop_exit
                  _
                %s238 = sshrl.u32 %s145, 1
                %s239 = sand.u32 %s145, 1
                %s240 = smul.u32 %s238, 2
                %s241 = smul.u32 8, %s240
                %s242 = scalar_lea.vmem %s149, %s241
                %s243 = smul.u32 8, %s240
                %s244 = scalar_lea.vmem %s138, %s243 [#allocation6]
                // While loop
                $region58: #{tpu_custom_call.1} parent=49 // loop_pre_header
                  _
                $region59: #{tpu_custom_call.1} parent=49 // loop_header
                  %s246 = sphi 0, %s248
                  %p247 = scmp.ge.s32.totalorder %s246, %s239
                  %s251 = sphi 0, %s260
                  %s252 = sphi %s242, %s263
                  %s253 = sphi %s244, %s264
                $region60: #{tpu_custom_call.1} parent=49 // loop_header_branch
                  %250 = sbr.rel (%p247) target = $region64
                $region61: #{tpu_custom_call.1} parent=49 // loop_body
                  %v254 = vld [vmem:[%s252] sm:$0xff]
                  %255 = vst [vmem:[%s253] sm:$0xff] %v254
                  %v256 = vld [vmem:[%s252 + $0x18] sm:$0xff]
                  %257 = vst [vmem:[%s253 + $0x10] sm:$0xff] %v256
                  %s258 = sadd.s32 1, %s251
                  %p259 = scmp.ge.s32.totalorder %s258, %s239
                  %s260 = scalar_select %p259, 0, %s258
                  %s261 = smul.u32 %s260, 8
                  %s262 = smul.u32 %s260, 8
                  %s263 = scalar_lea.vmem %s242, %s261
                  %s264 = scalar_lea.vmem %s244, %s262 [#allocation6]
                $region62: #{tpu_custom_call.1} parent=49 // loop_footer
                  %s248 = sadd.s32 %s246, 1
                $region63: #{tpu_custom_call.1} parent=49 // loop_footer_branch
                  %245 = sbr.rel target = $region59
                $region64: #{tpu_custom_call.1} parent=49 // loop_exit
                  _
              $region50: #{tpu_custom_call.1} parent=27 // pred_fallthru
                _
              // Predicated region
              $region65: #{tpu_custom_call.1} parent=27 // pred_check
                _
              $region66: #{tpu_custom_call.1} parent=27 // pred_check_branch
                %266 = sbr.rel target = $region68
              $region67: #{tpu_custom_call.1} parent=27 // pred_region
                _
              $region68: #{tpu_custom_call.1} parent=27 // pred_fallthru
                _
            $region28: #{tpu_custom_call.1} parent=23 // pred_fallthru
              _
            // Predicated region
            $region29: #{tpu_custom_call.1} parent=23 // pred_check
              _
            $region30: #{tpu_custom_call.1} parent=23 // pred_check_branch
              %156 = sbr.rel target = $region32
            $region31: #{tpu_custom_call.1} parent=23 // pred_region
              %s158 = ssub.s32 256, 1
              %s159 = sshrl.u32 %s145, 1
              // While loop
              $region33: #{tpu_custom_call.1} parent=31 // loop_pre_header
                _
              $region34: #{tpu_custom_call.1} parent=31 // loop_header
                %s161 = sphi 0, %s163
                %p162 = scmp.ge.s32.totalorder %s161, %s159
                %s166 = sphi 0, %s179
                %s167 = sphi %s149, %s182
                %s168 = sphi %s138, %s183
              $region35: #{tpu_custom_call.1} parent=31 // loop_header_branch
                %165 = sbr.rel (%p162) target = $region39
              $region36: #{tpu_custom_call.1} parent=31 // loop_body
                %v169 = vld [vmem:[%s167] sm:%s158]
                %170 = vst [vmem:[%s168] sm:%s158] %v169
                %v171 = vld [vmem:[%s167 + $0x8] sm:%s158]
                %172 = vst [vmem:[%s168 + $0x8] sm:%s158] %v171
                %v173 = vld [vmem:[%s167 + $0x18] sm:%s158]
                %174 = vst [vmem:[%s168 + $0x10] sm:%s158] %v173
                %v175 = vld [vmem:[%s167 + $0x20] sm:%s158]
                %176 = vst [vmem:[%s168 + $0x18] sm:%s158] %v175
                %s177 = sadd.s32 1, %s166
                %p178 = scmp.ge.s32.totalorder %s177, %s159
                %s179 = scalar_select %p178, 0, %s177
                %s180 = smul.u32 %s179, 16
                %s181 = smul.u32 %s179, 16
                %s182 = scalar_lea.vmem %s149, %s180
                %s183 = scalar_lea.vmem %s138, %s181 [#allocation6]
              $region37: #{tpu_custom_call.1} parent=31 // loop_footer
                %s163 = sadd.s32 %s161, 1
              $region38: #{tpu_custom_call.1} parent=31 // loop_footer_branch
                %160 = sbr.rel target = $region34
              $region39: #{tpu_custom_call.1} parent=31 // loop_exit
                _
              %s184 = sshrl.u32 %s145, 1
              %s185 = sand.u32 %s145, 1
              %s186 = smul.u32 %s184, 2
              %s187 = smul.u32 8, %s186
              %s188 = scalar_lea.vmem %s149, %s187
              %s189 = smul.u32 8, %s186
              %s190 = scalar_lea.vmem %s138, %s189 [#allocation6]
              // While loop
              $region40: #{tpu_custom_call.1} parent=31 // loop_pre_header
                _
              $region41: #{tpu_custom_call.1} parent=31 // loop_header
                %s192 = sphi 0, %s194
                %p193 = scmp.ge.s32.totalorder %s192, %s185
                %s197 = sphi 0, %s206
                %s198 = sphi %s188, %s209
                %s199 = sphi %s190, %s210
              $region42: #{tpu_custom_call.1} parent=31 // loop_header_branch
                %196 = sbr.rel (%p193) target = $region46
              $region43: #{tpu_custom_call.1} parent=31 // loop_body
                %v200 = vld [vmem:[%s198] sm:%s158]
                %201 = vst [vmem:[%s199] sm:%s158] %v200
                %v202 = vld [vmem:[%s198 + $0x18] sm:%s158]
                %203 = vst [vmem:[%s199 + $0x10] sm:%s158] %v202
                %s204 = sadd.s32 1, %s197
                %p205 = scmp.ge.s32.totalorder %s204, %s185
                %s206 = scalar_select %p205, 0, %s204
                %s207 = smul.u32 %s206, 8
                %s208 = smul.u32 %s206, 8
                %s209 = scalar_lea.vmem %s188, %s207
                %s210 = scalar_lea.vmem %s190, %s208 [#allocation6]
              $region44: #{tpu_custom_call.1} parent=31 // loop_footer
                %s194 = sadd.s32 %s192, 1
              $region45: #{tpu_custom_call.1} parent=31 // loop_footer_branch
                %191 = sbr.rel target = $region41
              $region46: #{tpu_custom_call.1} parent=31 // loop_exit
                _
            $region32: #{tpu_custom_call.1} parent=23 // pred_fallthru
              _
          $region24: #{tpu_custom_call.1} parent=19 // pred_fallthru
            _
          %267 = vnop
        $region20: #{tpu_custom_call.1} parent=15 // pred_fallthru
          _
        // Predicated region
        $region69: #{tpu_custom_call.1} parent=15 // pred_check
          %p268 = pneg %p81
        $region70: #{tpu_custom_call.1} parent=15 // pred_check_branch
          %270 = sbr.rel (%p268) target = $region72
        $region71: #{tpu_custom_call.1} parent=15 // pred_region
          %s271 = sadd.s32 %s18, %s19
          %p272 = scmp.lt.s32.totalorder %s271, 1
          %s273 = scalar_select %p272, %s271, 1
          %s274 = smul.u32 2, %s273
          %s275 = ssub.s32 3, %s274
          %p276 = scmp.lt.s32.totalorder %s275, 2
          %s277 = scalar_select %p276, %s275, 2
          %s278 = smul.u32 128, %s277
          %p279 = scmp.lt.s32.totalorder %s274, 2
          %s280 = scalar_select %p279, %s274, 2
          %s281 = smul.addr %s280, 8
          %s282 = scalar_lea.vmem %s1, %s281
          %s283 = sadd.s32 %s18, %s19
          %p284 = scmp.lt.s32.totalorder %s283, 1
          %s285 = scalar_select %p284, %s283, 1
          %s286 = smul.u32 2, %s285
          %s287 = ssub.s32 3, %s286
          %p288 = scmp.lt.s32.totalorder %s287, 2
          %s289 = scalar_select %p288, %s287, 2
          %s290 = smul.u32 128, %s289
        $region72: #{tpu_custom_call.1} parent=15 // pred_fallthru
          _
      $region16: #{tpu_custom_call.1} parent=5 // pred_fallthru
        _
      %p291 = scmp.le.s32.totalorder 1, %s11
      %p292 = scmp.lt.s32.totalorder %s11, 3
      %p293 = pnand %p291, %p292
      %p294 = pneg %p293
      // Predicated region
      $region73: #{tpu_custom_call.1} parent=5 // pred_check
        _
      $region74: #{tpu_custom_call.1} parent=5 // pred_check_branch
        %296 = sbr.rel (%p293) target = $region76
      $region75: #{tpu_custom_call.1} parent=5 // pred_region
        %s297 = ssub.s32 %s11, 1
        %s298 = sand.u32 %s42, 1
        %s299 = sand.u32 %s42, 1
        %s300 = smul.addr %s299, 32
        %s301 = scalar_lea.vmem [#allocation6], %s300
        // Predicated region
        $region77: #{tpu_custom_call.1} parent=75 // pred_check
          %p302 = pneg %p55
        $region78: #{tpu_custom_call.1} parent=75 // pred_check_branch
          %304 = sbr.rel (%p302) target = $region80
        $region79: #{tpu_custom_call.1} parent=75 // pred_region
          _
        $region80: #{tpu_custom_call.1} parent=75 // pred_fallthru
          _
        %s305 = sand.u32 %s42, 1
        %s306 = sand.u32 %s42, 1
        %s307 = smul.addr %s306, 32
        %s308 = scalar_lea.vmem [#allocation6], %s307
        %p309 = pneg %p55
        %p310 = pneg %p52
        %s311 = sadd.s32 %s20, %s21
        %p312 = scmp.lt.s32.totalorder %s311, 1
        %s313 = scalar_select %p312, %s311, 1
        %s314 = smul.u32 2, %s313
        %s315 = ssub.s32 3, %s314
        %p316 = scmp.lt.s32.totalorder %s315, 2
        %s317 = scalar_select %p316, %s315, 2
        %s318 = smul.u32 128, %s317
        %p319 = scmp.lt.s32.totalorder %s314, 2
        %s320 = scalar_select %p319, %s314, 2
        %s321 = smul.addr %s320, 8
        %s322 = scalar_lea.vmem %s1, %s321
        %p323 = pneg %p87
        %p324 = pneg %p84
        %p325 = pneg %p113
        %p326 = pneg %p110
        %s327 = sand.u32 %s100, 1
        %s328 = scalar_lea.sflag [#allocation8], %s327
        %s329 = sand.u32 %s100, 1
        %s330 = smul.addr %s329, 4
        %s331 = scalar_lea.vmem [#allocation7], %s330
        %s332 = sadd.s32 %s20, %s21
        %p333 = scmp.lt.s32.totalorder %s332, 1
        %s334 = scalar_select %p333, %s332, 1
        %s335 = smul.u32 2, %s334
        %s336 = ssub.s32 3, %s335
        %p337 = scmp.lt.s32.totalorder %s336, 2
        %s338 = scalar_select %p337, %s336, 2
        %s339 = smul.u32 256, %s338
        %s340 = sadd.s32 %s20, %s21
        %p341 = scmp.lt.s32.totalorder %s340, 1
        %s342 = scalar_select %p341, %s340, 1
        %s343 = smul.u32 2, %s342
        %s344 = ssub.s32 3, %s343
        %p345 = scmp.lt.s32.totalorder %s344, 2
        %s346 = scalar_select %p345, %s344, 2
        %s347 = smul.u32 128, %s346
        %p348 = scmp.lt.s32.totalorder %s343, 2
        %s349 = scalar_select %p348, %s343, 2
        %s350 = smul.addr %s349, 8
        %s351 = scalar_lea.vmem %s1, %s350
        %s352 = sadd.s32 %s20, %s21
        %p353 = scmp.lt.s32.totalorder %s352, 1
        %s354 = scalar_select %p353, %s352, 1
        %s355 = smul.u32 2, %s354
        %s356 = ssub.s32 3, %s355
        %p357 = scmp.lt.s32.totalorder %s356, 2
        %s358 = scalar_select %p357, %s356, 2
        %s359 = smul.u32 128, %s358
        %p360 = scmp.eq.s32.totalorder %s21, 0
        // Predicated region
        $region81: #{tpu_custom_call.1} parent=75 // pred_check
          %p361 = pneg %p360
        $region82: #{tpu_custom_call.1} parent=75 // pred_check_branch
          %363 = sbr.rel (%p361) target = $region84
        $region83: #{tpu_custom_call.1} parent=75 // pred_region
          %364 = vst [vmem:[#allocation2] sm:$0xff] 0.0
          %365 = vst [vmem:[#allocation2 + $0x8] sm:$0xff] 0.0
          %366 = vst [vmem:[#allocation3] sm:$0xff] 0.0
          %367 = vst [vmem:[#allocation3 + $0x8] sm:$0xff] 0.0
          %368 = vst [vmem:[#allocation4] sm:$0xff] 0.0
          %369 = vst [vmem:[#allocation4 + $0x8] sm:$0xff] 0.0
          %370 = vst [vmem:[#allocation5] sm:$0xff] 0.0
          %371 = vst [vmem:[#allocation5 + $0x8] sm:$0xff] 0.0
        $region84: #{tpu_custom_call.1} parent=75 // pred_fallthru
          _
        %s372 = sadd.s32 %s20, %s21
        %v373 = vlaneseq
        %v374 = vshrl.u32 %v373, 7
        %v375 = vadd.s32 %v374, 8
        %v376 = vlaneseq
        %v377 = vand.u32 %v376, 127
        %s378 = smul.u32 %s372, 16
        %v379 = vstv %s378
        %v380 = vadd.s32 %v379, %v374
        %v381 = vadd.s32 %v379, %v375
        %v382 = vmul.u32 %v380, 128
        %v383 = vmul.u32 %v381, 128
        %v384 = vadd.s32 %v382, %v377
        %v385 = vadd.s32 %v383, %v377
        %vm386 = vcmp.lt.s32.totalorder %v384, 2500
        %vm387 = vcmp.lt.s32.totalorder %v385, 2500
        %v388 = vsel %vm386, 1, 0
        %v389 = vsel %vm387, 1, 0
        %v390 = vcvt.s32.f32 %v388
        %v391 = vcvt.s32.f32 %v389
        %v392 = vld [vmem:[%s351] sm:$0xff]
        %v393 = vld [vmem:[%s351 + $0x8] sm:$0xff]
        %v394 = vsel %vm386, %v392, 0.0
        %v395 = vsel %vm387, %v393, 0.0
        %v396 = vld [vmem:[%s301] sm:$0xff]
        %v397 = vld [vmem:[%s301 + $0x8] sm:$0xff]
        %v398 = vld [vmem:[%s301 + $0x10] sm:$0xff]
        %v399 = vld [vmem:[%s301 + $0x18] sm:$0xff]
        %vm400 = vcmp.eq.s32.totalorder %v388, 1
        %vm401 = vcmp.eq.s32.totalorder %v389, 1
        %v402 = vsel %vm400, %v396, 0.0
        %v403 = vsel %vm401, %v397, 0.0
        %v404 = vsel %vm400, %v398, 0.0
        %v405 = vsel %vm401, %v399, 0.0
        %v406 = vmul.f32 %v394, 2.0
        %v407 = vmul.f32 %v395, 2.0
        %v408 = vsub.f32 %v406, 1.0
        %v409 = vsub.f32 %v407, 1.0
        %v410 = vmul.f32 %v394, -0.5
        %v411 = vmul.f32 %v395, -0.5
        %v412 = vadd.f32 %v410, 0.75
        %v413 = vadd.f32 %v411, 0.75
        %v414 = vmul.f32 %v412, %v390
        %v415 = vmul.f32 %v413, %v391
        %v416 = vmul.f32 %v402, %v408
        %v417 = vmul.f32 %v403, %v409
        %v418 = vmul.f32 %v404, %v408
        %v419 = vmul.f32 %v405, %v409
        %v420 = vand.u32 2147483647, %v402
        %v421 = vand.u32 2147483647, %v403
        %v422 = vand.u32 2147483647, %v404
        %v423 = vand.u32 2147483647, %v405
        %v424 = vsub.f32 0.0, %v420
        %v425 = vsub.f32 0.0, %v421
        %v426 = vsub.f32 0.0, %v422
        %v427 = vsub.f32 0.0, %v423
        %v428 = vmul.f32 %v424, 1.442695
        %v429 = vpow.pop %v428
        %v430 = vmul.f32 %v425, 1.442695
        %v431 = vpow.pop %v430
        %v432 = vmul.f32 %v426, 1.442695
        %v433 = vpow.pop %v432
        %v434 = vmul.f32 %v427, 1.442695
        %v435 = vpow.pop %v434
        %v436 = vsub.f32 0.0, %v416
        %v437 = vsub.f32 0.0, %v417
        %v438 = vsub.f32 0.0, %v418
        %v439 = vsub.f32 0.0, %v419
        %v440 = vmax.f32 %v436, 0.0
        %v441 = vmax.f32 %v437, 0.0
        %v442 = vmax.f32 %v438, 0.0
        %v443 = vmax.f32 %v439, 0.0
        %v444 = vadd.f32 %v429, 1.0
        %v445 = vlog2.pop %v444
        %v446 = vmul.f32 %v445, 0.6931472
        %v447 = vmul.f32 -0.5, %v429
        %v448 = vadd.f32 %v447, 1.0
        %v449 = vmul.f32 %v448, %v429
        %v450 = vand.u32 2147483647, %v429
        %vm451 = vcmp.lt.f32.partialorder %v450, 0.0004427343
        %v452 = vsel %vm451, %v449, %v446
        %v453 = vadd.f32 %v431, 1.0
        %v454 = vlog2.pop %v453
        %v455 = vmul.f32 %v454, 0.6931472
        %v456 = vmul.f32 -0.5, %v431
        %v457 = vadd.f32 %v456, 1.0
        %v458 = vmul.f32 %v457, %v431
        %v459 = vand.u32 2147483647, %v431
        %vm460 = vcmp.lt.f32.partialorder %v459, 0.0004427343
        %v461 = vsel %vm460, %v458, %v455
        %v462 = vadd.f32 %v433, 1.0
        %v463 = vlog2.pop %v462
        %v464 = vmul.f32 %v463, 0.6931472
        %v465 = vmul.f32 -0.5, %v433
        %v466 = vadd.f32 %v465, 1.0
        %v467 = vmul.f32 %v466, %v433
        %v468 = vand.u32 2147483647, %v433
        %vm469 = vcmp.lt.f32.partialorder %v468, 0.0004427343
        %v470 = vsel %vm469, %v467, %v464
        %v471 = vadd.f32 %v435, 1.0
        %v472 = vlog2.pop %v471
        %v473 = vmul.f32 %v472, 0.6931472
        %v474 = vmul.f32 -0.5, %v435
        %v475 = vadd.f32 %v474, 1.0
        %v476 = vmul.f32 %v475, %v435
        %v477 = vand.u32 2147483647, %v435
        %vm478 = vcmp.lt.f32.partialorder %v477, 0.0004427343
        %v479 = vsel %vm478, %v476, %v473
        %v480 = vadd.f32 %v440, %v452
        %v481 = vadd.f32 %v441, %v461
        %v482 = vadd.f32 %v442, %v470
        %v483 = vadd.f32 %v443, %v479
        %v484 = vadd.f32 %v429, 1.0
        %v485 = vadd.f32 %v431, 1.0
        %v486 = vadd.f32 %v433, 1.0
        %v487 = vadd.f32 %v435, 1.0
        %v488 = vrcp.pop %v484
        %v489 = vmul.f32 1.0, %v488
        %v490 = vrcp.pop %v485
        %v491 = vmul.f32 1.0, %v490
        %v492 = vrcp.pop %v486
        %v493 = vmul.f32 1.0, %v492
        %v494 = vrcp.pop %v487
        %v495 = vmul.f32 1.0, %v494
        %vm496 = vcmp.ge.f32.partialorder %v416, 0.0
        %vm497 = vcmp.ge.f32.partialorder %v417, 0.0
        %vm498 = vcmp.ge.f32.partialorder %v418, 0.0
        %vm499 = vcmp.ge.f32.partialorder %v419, 0.0
        %v500 = vsel %vm496, %v429, 1.0
        %v501 = vsel %vm497, %v431, 1.0
        %v502 = vsel %vm498, %v433, 1.0
        %v503 = vsel %vm499, %v435, 1.0
        %v504 = vmul.f32 %v500, %v489
        %v505 = vmul.f32 %v501, %v491
        %v506 = vmul.f32 %v502, %v493
        %v507 = vmul.f32 %v503, %v495
        %v508 = vmul.f32 %v504, %v504
        %v509 = vmul.f32 %v505, %v505
        %v510 = vmul.f32 %v506, %v506
        %v511 = vmul.f32 %v507, %v507
        %v512 = vmul.f32 %v480, %v508
        %v513 = vmul.f32 %v481, %v509
        %v514 = vmul.f32 %v482, %v510
        %v515 = vmul.f32 %v483, %v511
        %v516 = vadd.f32 %v512, %v514
        %v517 = vadd.f32 %v513, %v515
        %v518 = vmul.f32 %v516, %v414
        %v519 = vmul.f32 %v517, %v415
        %v520 = vld [vmem:[#allocation2] sm:$0xff]
        %v521 = vld [vmem:[#allocation2 + $0x8] sm:$0xff]
        %v522 = vadd.f32 %v520, %v518
        %v523 = vadd.f32 %v521, %v519
        %524 = vst [vmem:[#allocation2] sm:$0xff] %v522
        %525 = vst [vmem:[#allocation2 + $0x8] sm:$0xff] %v523
        %vm526 = vcmp.gt.f32.partialorder %v404, 0.0
        %vm527 = vcmp.gt.f32.partialorder %v405, 0.0
        %v528 = vsel %vm526, 1, 0
        %v529 = vsel %vm527, 1, 0
        %v530 = vcvt.s32.f32 %v528
        %v531 = vcvt.s32.f32 %v529
        %vm532 = vcmp.eq.f32.partialorder %v530, %v394
        %vm533 = vcmp.eq.f32.partialorder %v531, %v395
        %v534 = vsel %vm532, 1, 0
        %v535 = vsel %vm533, 1, 0
        %v536 = vcvt.s32.f32 %v534
        %v537 = vcvt.s32.f32 %v535
        %v538 = vmul.f32 %v536, %v390
        %v539 = vmul.f32 %v537, %v391
        %v540 = vld [vmem:[#allocation3] sm:$0xff]
        %v541 = vld [vmem:[#allocation3 + $0x8] sm:$0xff]
        %v542 = vmul.f32 %v538, %v394
        %v543 = vmul.f32 %v539, %v395
        %v544 = vadd.f32 %v540, %v542
        %v545 = vadd.f32 %v541, %v543
        %546 = vst [vmem:[#allocation3] sm:$0xff] %v544
        %547 = vst [vmem:[#allocation3 + $0x8] sm:$0xff] %v545
        %v548 = vld [vmem:[#allocation4] sm:$0xff]
        %v549 = vld [vmem:[#allocation4 + $0x8] sm:$0xff]
        %v550 = vsub.f32 1.0, %v394
        %v551 = vsub.f32 1.0, %v395
        %v552 = vmul.f32 %v538, %v550
        %v553 = vmul.f32 %v539, %v551
        %v554 = vadd.f32 %v548, %v552
        %v555 = vadd.f32 %v549, %v553
        %556 = vst [vmem:[#allocation4] sm:$0xff] %v554
        %557 = vst [vmem:[#allocation4 + $0x8] sm:$0xff] %v555
        %v558 = vld [vmem:[#allocation5] sm:$0xff]
        %v559 = vld [vmem:[#allocation5 + $0x8] sm:$0xff]
        %v560 = vadd.f32 %v558, %v394
        %v561 = vadd.f32 %v559, %v395
        %562 = vst [vmem:[#allocation5] sm:$0xff] %v560
        %563 = vst [vmem:[#allocation5 + $0x8] sm:$0xff] %v561
        // Predicated region
        $region85: #{tpu_custom_call.1} parent=75 // pred_check
          %p564 = pneg %p360
        $region86: #{tpu_custom_call.1} parent=75 // pred_check_branch
          %566 = sbr.rel (%p564) target = $region88
        $region87: #{tpu_custom_call.1} parent=75 // pred_region
          %v567 = vld [vmem:[#allocation2] sm:$0xff]
          %v568 = vld [vmem:[#allocation2 + $0x8] sm:$0xff]
          %v569 = vadd.f32 %v567, %v568
          %v570 = vrot.slane %v569, 4
          %v571 = vadd.f32 %v569, %v570
          %v572 = vrot.slane %v571, 2
          %v573 = vadd.f32 %v571, %v572
          %v574 = vrot.slane %v573, 1
          %v575 = vadd.f32 %v573, %v574
          %v576 = vld [vmem:[#allocation3] sm:$0xff]
          %v577 = vld [vmem:[#allocation3 + $0x8] sm:$0xff]
          %v578 = vadd.f32 %v576, %v577
          %v579 = vrot.slane %v578, 4
          %v580 = vadd.f32 %v578, %v579
          %v581 = vrot.slane %v580, 2
          %v582 = vadd.f32 %v580, %v581
          %v583 = vrot.slane %v582, 1
          %v584 = vadd.f32 %v582, %v583
          %v585 = vld [vmem:[#allocation4] sm:$0xff]
          %v586 = vld [vmem:[#allocation4 + $0x8] sm:$0xff]
          %v587 = vadd.f32 %v585, %v586
          %v588 = vrot.slane %v587, 4
          %v589 = vadd.f32 %v587, %v588
          %v590 = vrot.slane %v589, 2
          %v591 = vadd.f32 %v589, %v590
          %v592 = vrot.slane %v591, 1
          %v593 = vadd.f32 %v591, %v592
          %v594 = vld [vmem:[#allocation5] sm:$0xff]
          %v595 = vld [vmem:[#allocation5 + $0x8] sm:$0xff]
          %v596 = vadd.f32 %v594, %v595
          %v597 = vrot.slane %v596, 4
          %v598 = vadd.f32 %v596, %v597
          %v599 = vrot.slane %v598, 2
          %v600 = vadd.f32 %v598, %v599
          %v601 = vrot.slane %v600, 1
          %v602 = vadd.f32 %v600, %v601
          %vm603 = vcmask 1040384
          %v604 = vsel %vm603, %v575, %v584
          %vm605 = vcmask 1041408
          %v606 = vsel %vm605, %v604, %v593
          %vm607 = vcmask 1042432
          %v608 = vsel %vm607, %v606, %v602
          %609 = vst [vmem:[%s331] sm:$0xf] %v608
        $region88: #{tpu_custom_call.1} parent=75 // pred_fallthru
          _
        %s610 = sand.u32 %s100, 1
        %s611 = scalar_lea.sflag [#allocation8], %s610
        %s612 = sand.u32 %s100, 1
        %s613 = smul.addr %s612, 4
        %s614 = scalar_lea.vmem [#allocation7], %s613
        // Predicated region
        $region89: #{tpu_custom_call.1} parent=75 // pred_check
          %p615 = pneg %p110
        $region90: #{tpu_custom_call.1} parent=75 // pred_check_branch
          %617 = sbr.rel (%p615) target = $region92
        $region91: #{tpu_custom_call.1} parent=75 // pred_region
          %s619 = ssub.s32 64, 64
          %620 = vsyncadd %s611, %s619
          %s621 = smul.addr %s20, 64
          %s622 = scalar_lea.hbm %s2, %s621
          %s624 = sshll.u32 %s614, 4
          %s625 = int_to_ptr.vmem [resolvable:$true] %s624
          %627 = dma.vmem_to_hbm [thread:$0]  %s625, 64, %s622, %s611
        $region92: #{tpu_custom_call.1} parent=75 // pred_fallthru
          _
      $region76: #{tpu_custom_call.1} parent=5 // pred_fallthru
        _
      %p628 = scmp.le.s32.totalorder 2, %s11
      // Predicated region
      $region93: #{tpu_custom_call.1} parent=5 // pred_check
        %p629 = pneg %p628
      $region94: #{tpu_custom_call.1} parent=5 // pred_check_branch
        %631 = sbr.rel (%p629) target = $region96
      $region95: #{tpu_custom_call.1} parent=5 // pred_region
        %s632 = ssub.s32 %s11, 2
        // Predicated region
        $region97: #{tpu_custom_call.1} parent=95 // pred_check
          %p633 = pneg %p116
        $region98: #{tpu_custom_call.1} parent=95 // pred_check_branch
          %635 = sbr.rel (%p633) target = $region100
        $region99: #{tpu_custom_call.1} parent=95 // pred_region
          %s636 = sand.u32 %s101, 1
          %s637 = scalar_lea.sflag [#allocation8], %s636
          %s638 = sand.u32 %s101, 1
          %s639 = smul.addr %s638, 4
          %s640 = scalar_lea.vmem [#allocation7], %s639
          %641 = dma.done %s637, 64
        $region100: #{tpu_custom_call.1} parent=95 // pred_fallthru
          _
      $region96: #{tpu_custom_call.1} parent=5 // pred_fallthru
        _
    $region6: #{tpu_custom_call.1} parent=1 // loop_footer
      %s15 = sadd.s32 1, %s11
    $region7: #{tpu_custom_call.1} parent=1 // loop_footer_branch
      %10 = sbr.rel target = $region3
    $region8: #{tpu_custom_call.1} parent=1 // loop_exit
      _
    %642 = vsyncpa [#allocation8], 1
    %s643 = scalar_lea.sflag [#allocation8], 1
    %644 = vsyncpa %s643, 1

</llo_original>
